<compile_context>
chip_gen: v7x
topology: tpu7x:2x2x1
jax: 0.10.0
libtpu: 0.0.40
codegen_flags: <defaults>
</compile_context>

<pallas_src>
import functools

import numpy as np
import jax
import jax.numpy as jnp
from jax.experimental import pallas as pl
from jax.experimental.pallas import tpu as pltpu


def _round_up(v, m):
    return ((v + m - 1) // m) * m


def _choose_batch_tile(batch):
    """Pick the batch tile (rows per grid step); all static Python ints.

    * batch <= 512: one tile, one grid step (single-TC v5e/v6e pay nothing extra;
      at tiny batches v7x's second core has no useful work anyway).
    * larger batches: tiles in [512, 2048], sized so the grid has >= ~4 steps
      -- big enough to amortize the ~0.35 us per-step pipeline overhead,
      short enough that the "parallel" batch axis shards across v7x's 2 TCs.
    """
    b8 = _round_up(max(batch, 1), 8)
    if b8 <= 512:
        return b8
    tb = _round_up(-(-b8 // 4), 512)          # round_up(cdiv(b8, 4), 512)
    return max(512, min(tb, 2048))


def _policy_kernel(x_ref, w1_ref, b1_ref, w2_ref, b2_ref, wh_ref, bh_ref,
                   out_ref, *, action_dim):
    x = x_ref[...]                                                     # [TB, S]

    # fc1 + tanh  (contraction dim = true S; MXU pads K internally)
    h1 = jnp.tanh(
        jnp.dot(x, w1_ref[...], preferred_element_type=jnp.float32) + b1_ref[...]
    )                                                                  # [TB, H_pad]

    # fc2 + tanh
    h2 = jnp.tanh(
        jnp.dot(h1, w2_ref[...], preferred_element_type=jnp.float32) + b2_ref[...]
    )                                                                  # [TB, H_pad]

    # Fused heads: columns [0, A) -> mu, [A, 2A) -> std, rest is inert padding.
    pre = (
        jnp.dot(h2, wh_ref[...], preferred_element_type=jnp.float32) + bh_ref[...]
    )                                                                  # [TB, A2_pad]

    col = jax.lax.broadcasted_iota(jnp.int32, pre.shape, 1)
    mu_vals = (2.0 * np.pi) * jnp.tanh(pre)
    std_vals = jnp.logaddexp(pre, 0.0)          # numerically-stable softplus
    out_ref[...] = jnp.where(col < action_dim, mu_vals, std_vals)


def prepare_params(params):
    """One-time weight prep (call ONCE, outside the rollout / training hot loop).

    * mu/std heads fused: W_heads = concat([Wmu, Wstd], axis=1) -> single matmul,
      single lane-dense 128-wide output block.
    * Output feature dims zero-padded to multiples of 128 so every block is
      (8,128)-tile aligned (no masked stores / relayouts).  Zero padding is
      semantics-preserving: padded columns/rows never feed real outputs.
    * W1's row (contraction) dim stays at the true state_dim.

    Returns (weights, dims) with dims = (state_dim, hidden_dim, action_dim) as
    plain Python ints (static under jit).
    """
    w1, b1, w2, b2, wmu, bmu, wstd, bstd = params
    S, H = w1.shape
    A = wmu.shape[1]
    H_pad = _round_up(H, 128)
    A2_pad = _round_up(2 * A, 128)

    def pad2(a, rows, cols):
        a = a.astype(jnp.float32)
        return jnp.pad(a, ((0, rows - a.shape[0]), (0, cols - a.shape[1])))

    weights = (
        pad2(w1, S, H_pad),                                          # [S,     H_pad]
        pad2(b1, 1, H_pad),                                          # [1,     H_pad]
        pad2(w2, H_pad, H_pad),                                      # [H_pad, H_pad]
        pad2(b2, 1, H_pad),                                          # [1,     H_pad]
        pad2(jnp.concatenate([wmu, wstd], axis=1), H_pad, A2_pad),   # [H_pad, A2_pad]
        pad2(jnp.concatenate([bmu, bstd], axis=1), 1, A2_pad),       # [1,     A2_pad]
    )
    dims = (int(S), int(H), int(A))
    return weights, dims


@functools.partial(jax.jit, static_argnames=("dims",))
def policy_net_continuous(x, weights, *, dims):
    """Forward pass. `weights`/`dims` come from prepare_params()."""
    w1_p, b1_p, w2_p, b2_p, wh_p, bh_p = weights
    S, H, A = dims
    A2 = 2 * A
    B = x.shape[0]
    H_pad = w1_p.shape[1]
    A2_pad = wh_p.shape[1]

    TB = _choose_batch_tile(B)
    B_pad = _round_up(B, TB)

    x_p = x.astype(jnp.float32)
    if B_pad != B:                       # pad only the batch (sublane) dim
        x_p = jnp.pad(x_p, ((0, B_pad - B), (0, 0)))

    grid = (B_pad // TB,)

    # Advisory cost from the REAL (unpadded) dims.
    cost = pl.CostEstimate(
        flops=int(2 * B * (S * H + H * H + H * A2)),
        transcendentals=int(B * (2 * H + 3 * A)),
        bytes_accessed=int(4 * (B * S                      # x read
                                + S * H + H                # fc1
                                + H * H + H                # fc2
                                + H * A2 + A2              # fused heads
                                + B * A2)),                # output write
    )

    out = pl.pallas_call(
        functools.partial(_policy_kernel, action_dim=A),
        out_shape=jax.ShapeDtypeStruct((B_pad, A2_pad), jnp.float32),
        grid=grid,
        in_specs=[
            pl.BlockSpec((TB, S), lambda i: (i, 0)),          # x: streamed over batch
            pl.BlockSpec((S, H_pad), lambda i: (0, 0)),       # W1 (VMEM-resident)
            pl.BlockSpec((1, H_pad), lambda i: (0, 0)),       # b1
            pl.BlockSpec((H_pad, H_pad), lambda i: (0, 0)),   # W2
            pl.BlockSpec((1, H_pad), lambda i: (0, 0)),       # b2
            pl.BlockSpec((H_pad, A2_pad), lambda i: (0, 0)),  # W_heads (mu|std fused)
            pl.BlockSpec((1, A2_pad), lambda i: (0, 0)),      # b_heads
        ],
        out_specs=pl.BlockSpec((TB, A2_pad), lambda i: (i, 0)),
        compiler_params=pltpu.CompilerParams(
            dimension_semantics=("parallel",),   # batch axis shards across v7x's 2 TCs
            vmem_limit_bytes=32 * 1024 * 1024,
        ),
        cost_estimate=cost,
    )(x_p, *weights)

    y = out[:B, :A2]                     # single slice of the padded output
    return y[:, :A], y[:, A:]


def init_params(key, state_dim, hidden_dim, action_dim):
    """Deterministic PyTorch-Linear-style init (uniform +-1/sqrt(fan_in)).

    Weights stored as [in, out] (transpose of PyTorch); biases as [1, out].
    """
    ks = jax.random.split(key, 8)

    def linear(kw, kb, fan_in, fan_out):
        bound = 1.0 / np.sqrt(fan_in)
        w = jax.random.uniform(kw, (fan_in, fan_out), jnp.float32, -bound, bound)
        b = jax.random.uniform(kb, (1, fan_out), jnp.float32, -bound, bound)
        return w, b

    w1, b1 = linear(ks[0], ks[1], state_dim, hidden_dim)
    w2, b2 = linear(ks[2], ks[3], hidden_dim, hidden_dim)
    wmu, bmu = linear(ks[4], ks[5], hidden_dim, action_dim)
    wstd, bstd = linear(ks[6], ks[7], hidden_dim, action_dim)
    return (w1, b1, w2, b2, wmu, bmu, wstd, bstd)


def _reference(x, params):
    """Pure-JAX reference for correctness check."""
    w1, b1, w2, b2, wmu, bmu, wstd, bstd = params
    h1 = jnp.tanh(x @ w1 + b1)
    h2 = jnp.tanh(h1 @ w2 + b2)
    mu = 2.0 * np.pi * jnp.tanh(h2 @ wmu + bmu)
    std = jax.nn.softplus(h2 @ wstd + bstd)
    return mu, std


if __name__ == "__main__":
    # Small shapes consistent with the module: state_dim=4, hidden=32, action=2.
    B, STATE_DIM, HIDDEN_DIM, ACTION_DIM = 2, 4, 32, 2

    key = jax.random.PRNGKey(0)
    k_x, k_p = jax.random.split(key)

    x = jax.random.normal(k_x, (B, STATE_DIM), dtype=jnp.float32)
    params = init_params(k_p, STATE_DIM, HIDDEN_DIM, ACTION_DIM)

    # One-time weight preparation (outside the hot loop).
    weights, dims = prepare_params(params)

    mu, std = policy_net_continuous(x, weights, dims=dims)
    jax.block_until_ready((mu, std))

    mu_ref, std_ref = _reference(x, params)
    np.testing.assert_allclose(np.asarray(mu), np.asarray(mu_ref), rtol=1e-5, atol=1e-5)
    np.testing.assert_allclose(np.asarray(std), np.asarray(std_ref), rtol=1e-5, atol=1e-5)

    print("KERNEL_OK")
</pallas_src>

<mosaic_0001>
module attributes {stable_mosaic.version = 11 : i64} {
  func.func @_policy_kernel(%arg0: i32, %arg1: memref<8x4xf32, #tpu.memory_space<vmem>>, %arg2: memref<4x128xf32, #tpu.memory_space<vmem>>, %arg3: memref<1x128xf32, #tpu.memory_space<vmem>>, %arg4: memref<128x128xf32, #tpu.memory_space<vmem>>, %arg5: memref<1x128xf32, #tpu.memory_space<vmem>>, %arg6: memref<128x128xf32, #tpu.memory_space<vmem>>, %arg7: memref<1x128xf32, #tpu.memory_space<vmem>>, %arg8: memref<8x128xf32, #tpu.memory_space<vmem>>) attributes {dimension_semantics = [#tpu.dimension_semantics<parallel>], iteration_bounds = array<i64: 1>, scalar_prefetch = 0 : i64, scratch_operands = 0 : i64, tpu.core_type = #tpu.core_type<tc>, window_params = [{transform_indices = @transform_0, window_bounds = array<i64: 8, 4>}, {pipeline_mode = #tpu.pipeline_mode<synchronous>, transform_indices = @transform_1, window_bounds = array<i64: 4, 128>}, {pipeline_mode = #tpu.pipeline_mode<synchronous>, transform_indices = @transform_2, window_bounds = array<i64: 1, 128>}, {pipeline_mode = #tpu.pipeline_mode<synchronous>, transform_indices = @transform_3, window_bounds = array<i64: 128, 128>}, {pipeline_mode = #tpu.pipeline_mode<synchronous>, transform_indices = @transform_4, window_bounds = array<i64: 1, 128>}, {pipeline_mode = #tpu.pipeline_mode<synchronous>, transform_indices = @transform_5, window_bounds = array<i64: 128, 128>}, {pipeline_mode = #tpu.pipeline_mode<synchronous>, transform_indices = @transform_6, window_bounds = array<i64: 1, 128>}, {transform_indices = @transform_7, window_bounds = array<i64: 8, 128>}]} {
    %c0 = arith.constant 0 : index
    %c0_0 = arith.constant 0 : index
    %0 = vector.load %arg1[%c0, %c0_0] : memref<8x4xf32, #tpu.memory_space<vmem>>, vector<8x4xf32>
    %c0_1 = arith.constant 0 : index
    %c0_2 = arith.constant 0 : index
    %1 = vector.load %arg2[%c0_1, %c0_2] : memref<4x128xf32, #tpu.memory_space<vmem>>, vector<4x128xf32>
    %cst = arith.constant dense<0.000000e+00> : vector<8x128xf32>
    %2 = tpu.matmul %0, %1, %cst {dimension_numbers = #tpu.dot_dimension_numbers<[1], [0], [0], [1], [0, 0, 1, 1], [], []>} : vector<8x4xf32>, vector<4x128xf32>, vector<8x128xf32> -> vector<8x128xf32>
    %c0_3 = arith.constant 0 : index
    %c0_4 = arith.constant 0 : index
    %3 = vector.load %arg3[%c0_3, %c0_4] : memref<1x128xf32, #tpu.memory_space<vmem>>, vector<1x128xf32>
    %4 = vector.broadcast %3 : vector<1x128xf32> to vector<8x128xf32>
    %5 = arith.addf %2, %4 : vector<8x128xf32>
    %6 = math.tanh %5 : vector<8x128xf32>
    %c0_5 = arith.constant 0 : index
    %c0_6 = arith.constant 0 : index
    %7 = vector.load %arg4[%c0_5, %c0_6] : memref<128x128xf32, #tpu.memory_space<vmem>>, vector<128x128xf32>
    %cst_7 = arith.constant dense<0.000000e+00> : vector<8x128xf32>
    %8 = tpu.matmul %6, %7, %cst_7 {dimension_numbers = #tpu.dot_dimension_numbers<[1], [0], [0], [1], [0, 0, 1, 1], [], []>} : vector<8x128xf32>, vector<128x128xf32>, vector<8x128xf32> -> vector<8x128xf32>
    %c0_8 = arith.constant 0 : index
    %c0_9 = arith.constant 0 : index
    %9 = vector.load %arg5[%c0_8, %c0_9] : memref<1x128xf32, #tpu.memory_space<vmem>>, vector<1x128xf32>
    %10 = vector.broadcast %9 : vector<1x128xf32> to vector<8x128xf32>
    %11 = arith.addf %8, %10 : vector<8x128xf32>
    %12 = math.tanh %11 : vector<8x128xf32>
    %c0_10 = arith.constant 0 : index
    %c0_11 = arith.constant 0 : index
    %13 = vector.load %arg6[%c0_10, %c0_11] : memref<128x128xf32, #tpu.memory_space<vmem>>, vector<128x128xf32>
    %cst_12 = arith.constant dense<0.000000e+00> : vector<8x128xf32>
    %14 = tpu.matmul %12, %13, %cst_12 {dimension_numbers = #tpu.dot_dimension_numbers<[1], [0], [0], [1], [0, 0, 1, 1], [], []>} : vector<8x128xf32>, vector<128x128xf32>, vector<8x128xf32> -> vector<8x128xf32>
    %c0_13 = arith.constant 0 : index
    %c0_14 = arith.constant 0 : index
    %15 = vector.load %arg7[%c0_13, %c0_14] : memref<1x128xf32, #tpu.memory_space<vmem>>, vector<1x128xf32>
    %16 = vector.broadcast %15 : vector<1x128xf32> to vector<8x128xf32>
    %17 = arith.addf %14, %16 : vector<8x128xf32>
    %18 = tpu.iota {dimensions = array<i32: 1>} : vector<8x128xi32>
    %19 = math.tanh %17 : vector<8x128xf32>
    %cst_15 = arith.constant 6.28318548 : f32
    %20 = vector.broadcast %cst_15 : f32 to vector<8x128xf32>
    %21 = arith.mulf %20, %19 : vector<8x128xf32>
    %cst_16 = arith.constant 0.000000e+00 : f32
    %22 = vector.broadcast %cst_16 : f32 to vector<8x128xf32>
    %23 = arith.maximumf %17, %22 : vector<8x128xf32>
    %24 = vector.broadcast %cst_16 : f32 to vector<8x128xf32>
    %25 = arith.subf %17, %24 : vector<8x128xf32>
    %26 = arith.cmpf one, %25, %25 : vector<8x128xf32>
    %27 = vector.broadcast %cst_16 : f32 to vector<8x128xf32>
    %28 = arith.addf %17, %27 : vector<8x128xf32>
    %29 = math.absf %25 : vector<8x128xf32>
    %cst_17 = arith.constant 0.000000e+00 : f32
    %30 = vector.broadcast %cst_17 : f32 to vector<8x128xf32>
    %31 = arith.subf %30, %29 : vector<8x128xf32>
    %32 = math.exp %31 : vector<8x128xf32>
    %33 = math.log1p %32 : vector<8x128xf32>
    %34 = arith.addf %23, %33 : vector<8x128xf32>
    %35 = arith.select %26, %28, %34 : vector<8x128xi1>, vector<8x128xf32>
    %c2_i32 = arith.constant 2 : i32
    %36 = vector.broadcast %c2_i32 : i32 to vector<8x128xi32>
    %37 = arith.cmpi slt, %18, %36 : vector<8x128xi32>
    %38 = arith.select %37, %21, %35 : vector<8x128xi1>, vector<8x128xf32>
    %c0_18 = arith.constant 0 : index
    %c0_19 = arith.constant 0 : index
    %39 = vector.load %arg8[%c0_18, %c0_19] : memref<8x128xf32, #tpu.memory_space<vmem>>, vector<8x128xf32>
    tpu.vector_store %arg8[%c0_18, %c0_19], %38 {strides = array<i32>} : memref<8x128xf32, #tpu.memory_space<vmem>>, vector<8x128xf32>,
    return
  }
  func.func @transform_0(%arg0: i32) -> (i32, i32) {
    %c0_i32 = arith.constant 0 : i32
    %c0_i32_0 = arith.constant 0 : i32
    return %arg0, %c0_i32 : i32, i32
  }
  func.func @transform_1(%arg0: i32) -> (i32, i32) {
    %c0_i32 = arith.constant 0 : i32
    %c0_i32_0 = arith.constant 0 : i32
    %c0_i32_1 = arith.constant 0 : i32
    return %c0_i32, %c0_i32_0 : i32, i32
  }
  func.func @transform_2(%arg0: i32) -> (i32, i32) {
    %c0_i32 = arith.constant 0 : i32
    %c0_i32_0 = arith.constant 0 : i32
    %c0_i32_1 = arith.constant 0 : i32
    return %c0_i32, %c0_i32_0 : i32, i32
  }
  func.func @transform_3(%arg0: i32) -> (i32, i32) {
    %c0_i32 = arith.constant 0 : i32
    %c0_i32_0 = arith.constant 0 : i32
    %c0_i32_1 = arith.constant 0 : i32
    return %c0_i32, %c0_i32_0 : i32, i32
  }
  func.func @transform_4(%arg0: i32) -> (i32, i32) {
    %c0_i32 = arith.constant 0 : i32
    %c0_i32_0 = arith.constant 0 : i32
    %c0_i32_1 = arith.constant 0 : i32
    return %c0_i32, %c0_i32_0 : i32, i32
  }
  func.func @transform_5(%arg0: i32) -> (i32, i32) {
    %c0_i32 = arith.constant 0 : i32
    %c0_i32_0 = arith.constant 0 : i32
    %c0_i32_1 = arith.constant 0 : i32
    return %c0_i32, %c0_i32_0 : i32, i32
  }
  func.func @transform_6(%arg0: i32) -> (i32, i32) {
    %c0_i32 = arith.constant 0 : i32
    %c0_i32_0 = arith.constant 0 : i32
    %c0_i32_1 = arith.constant 0 : i32
    return %c0_i32, %c0_i32_0 : i32, i32
  }
  func.func @transform_7(%arg0: i32) -> (i32, i32) {
    %c0_i32 = arith.constant 0 : i32
    %c0_i32_0 = arith.constant 0 : i32
    return %arg0, %c0_i32 : i32, i32
  }
}

</mosaic_0001>

<llo_original>
// kernel: policy_net_continuous.1
$region0: #{policy_net_continuous.1}
  #allocation0 [shape = 'u32[]', space=smem, size = 0x4, offset = 0x4, fixed_abs, tag = 'smem constant byte address 0x4 - core index']
  #allocation1 [shape = 'u32[144,128]{1,0:T(1,128)}', space=vmem, size = 0x12000, scoped, tag = 'internal scratch']
  %s0 = inlined_call_operand.vmem [shape: f32[8,4], index: 0, kind: input, shape index: {}]
  %s1 = inlined_call_operand.vmem [shape: f32[4,128], index: 1, kind: input, shape index: {}]
  %s2 = inlined_call_operand.vmem [shape: f32[1,128], index: 2, kind: input, shape index: {}]
  %s3 = inlined_call_operand.hbm [shape: f32[128,128], index: 3, kind: input, shape index: {}]
  %s4 = inlined_call_operand.vmem [shape: f32[1,128], index: 4, kind: input, shape index: {}]
  %s5 = inlined_call_operand.hbm [shape: f32[128,128], index: 5, kind: input, shape index: {}]
  %s6 = inlined_call_operand.vmem [shape: f32[1,128], index: 6, kind: input, shape index: {}]
  %s7 = inlined_call_operand.vmem [shape: f32[8,128], index: 7, kind: output, shape index: {}]
  %s8 = sld [smem:[#allocation0]]
  $region46: #{policy_net_continuous.1} parent=0
    _
  %s10 = ssub.s32 1, %s8
  %s11 = scalar_select 0, %s10, %s8
  $region1: #{policy_net_continuous.1} parent=0
    #allocation2 [shape = 'u8[65536]{0}', space=vmem, size = 0x10000, scoped, tag = 'input window, operand 3, single buffered']
    #allocation3 [shape = 's32[1]{0}', space=sflag, size = 0x4, scoped, tag = 'scoped memory for policy_net_continuous.1']
    #allocation4 [shape = 'u8[65536]{0}', space=vmem, size = 0x10000, scoped, tag = 'input window, operand 5, single buffered']
    #allocation5 [shape = 's32[1]{0}', space=sflag, size = 0x4, scoped, tag = 'scoped memory for policy_net_continuous.1']
    %12 = vsyncpa [#allocation3], 0
    %13 = vsyncpa [#allocation5], 0
    // Predicated region
    $region2: #{policy_net_continuous.1} parent=1 // pred_check
      _
    $region3: #{policy_net_continuous.1} parent=1 // pred_check_branch
      %15 = sbr.rel (0) target = $region5
    $region4: #{policy_net_continuous.1} parent=1 // pred_region
      _
    $region5: #{policy_net_continuous.1} parent=1 // pred_fallthru
      _
    // Predicated region
    $region6: #{policy_net_continuous.1} parent=1 // pred_check
      _
    $region7: #{policy_net_continuous.1} parent=1 // pred_check_branch
      %17 = sbr.rel (0) target = $region9
    $region8: #{policy_net_continuous.1} parent=1 // pred_region
      _
    $region9: #{policy_net_continuous.1} parent=1 // pred_fallthru
      _
    // Predicated region
    $region10: #{policy_net_continuous.1} parent=1 // pred_check
      _
    $region11: #{policy_net_continuous.1} parent=1 // pred_check_branch
      %19 = sbr.rel (0) target = $region13
    $region12: #{policy_net_continuous.1} parent=1 // pred_region
      _
    $region13: #{policy_net_continuous.1} parent=1 // pred_fallthru
      _
    // Predicated region
    $region14: #{policy_net_continuous.1} parent=1 // pred_check
      _
    $region15: #{policy_net_continuous.1} parent=1 // pred_check_branch
      %21 = sbr.rel (0) target = $region17
    $region16: #{policy_net_continuous.1} parent=1 // pred_region
      %s23 = ssub.s32 2048, 2048
      %24 = vsyncadd [#allocation3], %s23
      %s25 = sshll.u32 [#allocation2], 4
      %s26 = int_to_ptr.vmem [resolvable:$true] %s25
      %31 = dma.hbm_to_vmem [thread:$0]  %s3, 2048, %s26, [#allocation3], 128, 128, 8
    $region17: #{policy_net_continuous.1} parent=1 // pred_fallthru
      _
    // Predicated region
    $region18: #{policy_net_continuous.1} parent=1 // pred_check
      _
    $region19: #{policy_net_continuous.1} parent=1 // pred_check_branch
      %33 = sbr.rel (0) target = $region21
    $region20: #{policy_net_continuous.1} parent=1 // pred_region
      _
    $region21: #{policy_net_continuous.1} parent=1 // pred_fallthru
      _
    // Predicated region
    $region22: #{policy_net_continuous.1} parent=1 // pred_check
      _
    $region23: #{policy_net_continuous.1} parent=1 // pred_check_branch
      %35 = sbr.rel (0) target = $region25
    $region24: #{policy_net_continuous.1} parent=1 // pred_region
      %s37 = ssub.s32 2048, 2048
      %38 = vsyncadd [#allocation5], %s37
      %s39 = sshll.u32 [#allocation4], 4
      %s40 = int_to_ptr.vmem [resolvable:$true] %s39
      %45 = dma.hbm_to_vmem [thread:$0]  %s5, 2048, %s40, [#allocation5], 128, 128, 8
    $region25: #{policy_net_continuous.1} parent=1 // pred_fallthru
      _
    // Predicated region
    $region26: #{policy_net_continuous.1} parent=1 // pred_check
      _
    $region27: #{policy_net_continuous.1} parent=1 // pred_check_branch
      %47 = sbr.rel (0) target = $region29
    $region28: #{policy_net_continuous.1} parent=1 // pred_region
      _
    $region29: #{policy_net_continuous.1} parent=1 // pred_fallthru
      _
    // Predicated region
    $region30: #{policy_net_continuous.1} parent=1 // pred_check
      _
    $region31: #{policy_net_continuous.1} parent=1 // pred_check_branch
      %49 = sbr.rel (0) target = $region33
    $region32: #{policy_net_continuous.1} parent=1 // pred_region
      %50 = dma.done [#allocation3], 2048
    $region33: #{policy_net_continuous.1} parent=1 // pred_fallthru
      _
    // Predicated region
    $region34: #{policy_net_continuous.1} parent=1 // pred_check
      _
    $region35: #{policy_net_continuous.1} parent=1 // pred_check_branch
      %52 = sbr.rel (0) target = $region37
    $region36: #{policy_net_continuous.1} parent=1 // pred_region
      %53 = dma.done [#allocation5], 2048
    $region37: #{policy_net_continuous.1} parent=1 // pred_fallthru
      _
    %v54 = vld [vmem:[%s0] sm:$0xff]
    %v55 = vld [vmem:[%s1] sm:$0xf]
    %v56 = vld [vmem:[%s2] sm:$0x1]
    %v58 = vlaneseq
    %v59 = vshrl.u32 %v58, 7
    %v60 = vsub.s32 0, %v59
    %v61 = vrot.slane %v56, %v60
    %vm63 = vcmask 31744
    %v65 = vsel %vm63, %v54, 0
    %vm67 = vcmask 1043456
    %v69 = vsel %vm67, %v55, 0
    %71 = vmatprep.subr.mxu0 0.0
    %72 = vmatpush1.msra.mxu0 %v69
    %73 = vmatprep.subr.mxu0 0.0
    %74 = vmatpush1.msra.mxu0 0.0
    %75 = vmatprep.subr.mxu0 0.0
    %76 = vmatpush1.msra.mxu0 0.0
    %77 = vmatprep.subr.mxu0 0.0
    %78 = vmatpush1.msra.mxu0 0.0
    %79 = vmatprep.subr.mxu0 0.0
    %80 = vmatpush1.msra.mxu0 0.0
    %81 = vmatprep.subr.mxu0 0.0
    %82 = vmatpush1.msra.mxu0 0.0
    %83 = vmatprep.subr.mxu0 0.0
    %84 = vmatpush1.msra.mxu0 0.0
    %85 = vmatprep.subr.mxu0 0.0
    %86 = vmatpush1.msra.mxu0 0.0
    %87 = vmatprep.subr.mxu0 0.0
    %88 = vmatpush1.msra.mxu0 0.0
    %89 = vmatprep.subr.mxu0 0.0
    %90 = vmatpush1.msra.mxu0 0.0
    %91 = vmatprep.subr.mxu0 0.0
    %92 = vmatpush1.msra.mxu0 0.0
    %93 = vmatprep.subr.mxu0 0.0
    %94 = vmatpush1.msra.mxu0 0.0
    %95 = vmatprep.subr.mxu0 0.0
    %96 = vmatpush1.msra.mxu0 0.0
    %97 = vmatprep.subr.mxu0 0.0
    %98 = vmatpush1.msra.mxu0 0.0
    %99 = vmatprep.subr.mxu0 0.0
    %100 = vmatpush1.msra.mxu0 0.0
    %101 = vmatprep.subr.mxu0 0.0
    %102 = vmatpush1.msra.mxu0 0.0
    %103 = vmatprep.subr.mxu0 0.0
    %104 = vmatpush1.msra.mxu0 0.0
    %105 = vmatprep.subr.mxu0 0.0
    %106 = vmatpush1.msra.mxu0 0.0
    %107 = vmatprep.subr.mxu0 0.0
    %108 = vmatpush1.msra.mxu0 0.0
    %109 = vmatprep.subr.mxu0 0.0
    %110 = vmatpush1.msra.mxu0 0.0
    %111 = vmatprep.subr.mxu0 0.0
    %112 = vmatpush1.msra.mxu0 0.0
    %113 = vmatprep.subr.mxu0 0.0
    %114 = vmatpush1.msra.mxu0 0.0
    %115 = vmatprep.subr.mxu0 0.0
    %116 = vmatpush1.msra.mxu0 0.0
    %117 = vmatprep.subr.mxu0 0.0
    %118 = vmatpush1.msra.mxu0 0.0
    %119 = vmatprep.subr.mxu0 0.0
    %120 = vmatpush1.msra.mxu0 0.0
    %121 = vmatprep.subr.mxu0 0.0
    %122 = vmatpush1.msra.mxu0 0.0
    %123 = vmatprep.subr.mxu0 0.0
    %124 = vmatpush1.msra.mxu0 0.0
    %125 = vmatprep.subr.mxu0 0.0
    %126 = vmatpush1.msra.mxu0 0.0
    %127 = vmatprep.subr.mxu0 0.0
    %128 = vmatpush1.msra.mxu0 0.0
    %129 = vmatprep.subr.mxu0 0.0
    %130 = vmatpush1.msra.mxu0 0.0
    %131 = vmatprep.subr.mxu0 0.0
    %132 = vmatpush1.msra.mxu0 0.0
    %133 = vmatprep.subr.mxu0 0.0
    %134 = vmatpush1.msra.mxu0 0.0
    %135 = vmatprep.mubr.f32.mxu0 0.0
    %136 = vmatmul.mubr.f32.gmra.mrb[0].mxu0 %v65
    %v137 = vpop.f32.mrb[0].mxu0
    %v138 = vadd.f32 %v61, %v137
    %v139 = vpop.f32.mrb[0].mxu0
    %140 = vdwg.mxu0
    %v141 = vtanh.pop %v138
    %v142 = vld [vmem:[#allocation2] sm:$0xff]
    %v143 = vld [vmem:[#allocation2 + $0x8] sm:$0xff]
    %v144 = vld [vmem:[#allocation2 + $0x10] sm:$0xff]
    %v145 = vld [vmem:[#allocation2 + $0x18] sm:$0xff]
    %v146 = vld [vmem:[#allocation2 + $0x20] sm:$0xff]
    %v147 = vld [vmem:[#allocation2 + $0x28] sm:$0xff]
    %v148 = vld [vmem:[#allocation2 + $0x30] sm:$0xff]
    %v149 = vld [vmem:[#allocation2 + $0x38] sm:$0xff]
    %v150 = vld [vmem:[#allocation2 + $0x40] sm:$0xff]
    %v151 = vld [vmem:[#allocation2 + $0x48] sm:$0xff]
    %v152 = vld [vmem:[#allocation2 + $0x50] sm:$0xff]
    %v153 = vld [vmem:[#allocation2 + $0x58] sm:$0xff]
    %v154 = vld [vmem:[#allocation2 + $0x60] sm:$0xff]
    %v155 = vld [vmem:[#allocation2 + $0x68] sm:$0xff]
    %v156 = vld [vmem:[#allocation2 + $0x70] sm:$0xff]
    %v157 = vld [vmem:[#allocation2 + $0x78] sm:$0xff]
    %v158 = vld [vmem:[%s4] sm:$0x1]
    %v160 = vlaneseq
    %v161 = vshrl.u32 %v160, 7
    %v162 = vsub.s32 0, %v161
    %v163 = vrot.slane %v158, %v162
    %165 = vmatprep.subr.mxu0 0.0
    %166 = vmatpush1.msra.mxu0 %v142
    %167 = vmatprep.subr.mxu0 0.0
    %168 = vmatpush1.msra.mxu0 %v143
    %169 = vmatprep.subr.mxu0 0.0
    %170 = vmatpush1.msra.mxu0 %v144
    %171 = vmatprep.subr.mxu0 0.0
    %172 = vmatpush1.msra.mxu0 %v145
    %173 = vmatprep.subr.mxu0 0.0
    %174 = vmatpush1.msra.mxu0 %v146
    %175 = vmatprep.subr.mxu0 0.0
    %176 = vmatpush1.msra.mxu0 %v147
    %177 = vmatprep.subr.mxu0 0.0
    %178 = vmatpush1.msra.mxu0 %v148
    %179 = vmatprep.subr.mxu0 0.0
    %180 = vmatpush1.msra.mxu0 %v149
    %181 = vmatprep.subr.mxu0 0.0
    %182 = vmatpush1.msra.mxu0 %v150
    %183 = vmatprep.subr.mxu0 0.0
    %184 = vmatpush1.msra.mxu0 %v151
    %185 = vmatprep.subr.mxu0 0.0
    %186 = vmatpush1.msra.mxu0 %v152
    %187 = vmatprep.subr.mxu0 0.0
    %188 = vmatpush1.msra.mxu0 %v153
    %189 = vmatprep.subr.mxu0 0.0
    %190 = vmatpush1.msra.mxu0 %v154
    %191 = vmatprep.subr.mxu0 0.0
    %192 = vmatpush1.msra.mxu0 %v155
    %193 = vmatprep.subr.mxu0 0.0
    %194 = vmatpush1.msra.mxu0 %v156
    %195 = vmatprep.subr.mxu0 0.0
    %196 = vmatpush1.msra.mxu0 %v157
    %197 = vmatprep.subr.mxu0 0.0
    %198 = vmatpush1.msra.mxu0 0.0
    %199 = vmatprep.subr.mxu0 0.0
    %200 = vmatpush1.msra.mxu0 0.0
    %201 = vmatprep.subr.mxu0 0.0
    %202 = vmatpush1.msra.mxu0 0.0
    %203 = vmatprep.subr.mxu0 0.0
    %204 = vmatpush1.msra.mxu0 0.0
    %205 = vmatprep.subr.mxu0 0.0
    %206 = vmatpush1.msra.mxu0 0.0
    %207 = vmatprep.subr.mxu0 0.0
    %208 = vmatpush1.msra.mxu0 0.0
    %209 = vmatprep.subr.mxu0 0.0
    %210 = vmatpush1.msra.mxu0 0.0
    %211 = vmatprep.subr.mxu0 0.0
    %212 = vmatpush1.msra.mxu0 0.0
    %213 = vmatprep.subr.mxu0 0.0
    %214 = vmatpush1.msra.mxu0 0.0
    %215 = vmatprep.subr.mxu0 0.0
    %216 = vmatpush1.msra.mxu0 0.0
    %217 = vmatprep.subr.mxu0 0.0
    %218 = vmatpush1.msra.mxu0 0.0
    %219 = vmatprep.subr.mxu0 0.0
    %220 = vmatpush1.msra.mxu0 0.0
    %221 = vmatprep.subr.mxu0 0.0
    %222 = vmatpush1.msra.mxu0 0.0
    %223 = vmatprep.subr.mxu0 0.0
    %224 = vmatpush1.msra.mxu0 0.0
    %225 = vmatprep.subr.mxu0 0.0
    %226 = vmatpush1.msra.mxu0 0.0
    %227 = vmatprep.subr.mxu0 0.0
    %228 = vmatpush1.msra.mxu0 0.0
    %229 = vmatprep.mubr.f32.mxu0 0.0
    %230 = vmatmul.mubr.f32.gmra.mrb[0].mxu0 %v141
    %v231 = vpop.f32.mrb[0].mxu0
    %v232 = vadd.f32 %v163, %v231
    %v233 = vpop.f32.mrb[0].mxu0
    %234 = vdwg.mxu0
    %v235 = vtanh.pop %v232
    %v236 = vld [vmem:[#allocation4] sm:$0xff]
    %v237 = vld [vmem:[#allocation4 + $0x8] sm:$0xff]
    %v238 = vld [vmem:[#allocation4 + $0x10] sm:$0xff]
    %v239 = vld [vmem:[#allocation4 + $0x18] sm:$0xff]
    %v240 = vld [vmem:[#allocation4 + $0x20] sm:$0xff]
    %v241 = vld [vmem:[#allocation4 + $0x28] sm:$0xff]
    %v242 = vld [vmem:[#allocation4 + $0x30] sm:$0xff]
    %v243 = vld [vmem:[#allocation4 + $0x38] sm:$0xff]
    %v244 = vld [vmem:[#allocation4 + $0x40] sm:$0xff]
    %v245 = vld [vmem:[#allocation4 + $0x48] sm:$0xff]
    %v246 = vld [vmem:[#allocation4 + $0x50] sm:$0xff]
    %v247 = vld [vmem:[#allocation4 + $0x58] sm:$0xff]
    %v248 = vld [vmem:[#allocation4 + $0x60] sm:$0xff]
    %v249 = vld [vmem:[#allocation4 + $0x68] sm:$0xff]
    %v250 = vld [vmem:[#allocation4 + $0x70] sm:$0xff]
    %v251 = vld [vmem:[#allocation4 + $0x78] sm:$0xff]
    %v252 = vld [vmem:[%s6] sm:$0x1]
    %v254 = vlaneseq
    %v255 = vshrl.u32 %v254, 7
    %v256 = vsub.s32 0, %v255
    %v257 = vrot.slane %v252, %v256
    %259 = vmatprep.subr.mxu0 0.0
    %260 = vmatpush1.msra.mxu0 %v236
    %261 = vmatprep.subr.mxu0 0.0
    %262 = vmatpush1.msra.mxu0 %v237
    %263 = vmatprep.subr.mxu0 0.0
    %264 = vmatpush1.msra.mxu0 %v238
    %265 = vmatprep.subr.mxu0 0.0
    %266 = vmatpush1.msra.mxu0 %v239
    %267 = vmatprep.subr.mxu0 0.0
    %268 = vmatpush1.msra.mxu0 %v240
    %269 = vmatprep.subr.mxu0 0.0
    %270 = vmatpush1.msra.mxu0 %v241
    %271 = vmatprep.subr.mxu0 0.0
    %272 = vmatpush1.msra.mxu0 %v242
    %273 = vmatprep.subr.mxu0 0.0
    %274 = vmatpush1.msra.mxu0 %v243
    %275 = vmatprep.subr.mxu0 0.0
    %276 = vmatpush1.msra.mxu0 %v244
    %277 = vmatprep.subr.mxu0 0.0
    %278 = vmatpush1.msra.mxu0 %v245
    %279 = vmatprep.subr.mxu0 0.0
    %280 = vmatpush1.msra.mxu0 %v246
    %281 = vmatprep.subr.mxu0 0.0
    %282 = vmatpush1.msra.mxu0 %v247
    %283 = vmatprep.subr.mxu0 0.0
    %284 = vmatpush1.msra.mxu0 %v248
    %285 = vmatprep.subr.mxu0 0.0
    %286 = vmatpush1.msra.mxu0 %v249
    %287 = vmatprep.subr.mxu0 0.0
    %288 = vmatpush1.msra.mxu0 %v250
    %289 = vmatprep.subr.mxu0 0.0
    %290 = vmatpush1.msra.mxu0 %v251
    %291 = vmatprep.subr.mxu0 0.0
    %292 = vmatpush1.msra.mxu0 0.0
    %293 = vmatprep.subr.mxu0 0.0
    %294 = vmatpush1.msra.mxu0 0.0
    %295 = vmatprep.subr.mxu0 0.0
    %296 = vmatpush1.msra.mxu0 0.0
    %297 = vmatprep.subr.mxu0 0.0
    %298 = vmatpush1.msra.mxu0 0.0
    %299 = vmatprep.subr.mxu0 0.0
    %300 = vmatpush1.msra.mxu0 0.0
    %301 = vmatprep.subr.mxu0 0.0
    %302 = vmatpush1.msra.mxu0 0.0
    %303 = vmatprep.subr.mxu0 0.0
    %304 = vmatpush1.msra.mxu0 0.0
    %305 = vmatprep.subr.mxu0 0.0
    %306 = vmatpush1.msra.mxu0 0.0
    %307 = vmatprep.subr.mxu0 0.0
    %308 = vmatpush1.msra.mxu0 0.0
    %309 = vmatprep.subr.mxu0 0.0
    %310 = vmatpush1.msra.mxu0 0.0
    %311 = vmatprep.subr.mxu0 0.0
    %312 = vmatpush1.msra.mxu0 0.0
    %313 = vmatprep.subr.mxu0 0.0
    %314 = vmatpush1.msra.mxu0 0.0
    %315 = vmatprep.subr.mxu0 0.0
    %316 = vmatpush1.msra.mxu0 0.0
    %317 = vmatprep.subr.mxu0 0.0
    %318 = vmatpush1.msra.mxu0 0.0
    %319 = vmatprep.subr.mxu0 0.0
    %320 = vmatpush1.msra.mxu0 0.0
    %321 = vmatprep.subr.mxu0 0.0
    %322 = vmatpush1.msra.mxu0 0.0
    %323 = vmatprep.mubr.f32.mxu0 0.0
    %324 = vmatmul.mubr.f32.gmra.mrb[0].mxu0 %v235
    %v325 = vpop.f32.mrb[0].mxu0
    %v326 = vadd.f32 %v257, %v325
    %v327 = vpop.f32.mrb[0].mxu0
    %328 = vdwg.mxu0
    %v329 = vlaneseq
    %v330 = vand.u32 %v329, 127
    %v331 = vtanh.pop %v326
    %v332 = vmul.f32 %v331, 6.2831855
    %v333 = vmax.f32 %v326, 0.0
    %vm334 = vcmp.ne.f32.partialorder %v326, %v326
    %v335 = vadd.f32 %v326, 0.0
    %v336 = vand.u32 2147483647, %v326
    %v337 = vsub.f32 0.0, %v336
    %v338 = vmul.f32 %v337, 1.442695
    %v339 = vpow.pop %v338
    %v340 = vadd.f32 %v339, 1.0
    %v341 = vlog2.pop %v340
    %v342 = vmul.f32 %v341, 0.6931472
    %v343 = vmul.f32 -0.5, %v339
    %v344 = vadd.f32 %v343, 1.0
    %v345 = vmul.f32 %v344, %v339
    %v346 = vand.u32 2147483647, %v339
    %vm347 = vcmp.lt.f32.partialorder %v346, 0.0004427343
    %v348 = vsel %vm347, %v345, %v342
    %v349 = vadd.f32 %v333, %v348
    %v350 = vsel %vm334, %v335, %v349
    %vm351 = vcmp.lt.s32.totalorder %v330, 2
    %v352 = vsel %vm351, %v332, %v350
    %353 = vst [vmem:[%s7] sm:$0xff] %v352
    // Predicated region
    $region38: #{policy_net_continuous.1} parent=1 // pred_check
      _
    $region39: #{policy_net_continuous.1} parent=1 // pred_check_branch
      %355 = sbr.rel (0) target = $region41
    $region40: #{policy_net_continuous.1} parent=1 // pred_region
      _
    $region41: #{policy_net_continuous.1} parent=1 // pred_fallthru
      _
    // Predicated region
    $region42: #{policy_net_continuous.1} parent=1 // pred_check
      _
    $region43: #{policy_net_continuous.1} parent=1 // pred_check_branch
      %357 = sbr.rel (0) target = $region45
    $region44: #{policy_net_continuous.1} parent=1 // pred_region
      _
    $region45: #{policy_net_continuous.1} parent=1 // pred_fallthru
      _
    %358 = vsyncpa [#allocation3], 1
    %359 = vsyncpa [#allocation5], 1

</llo_original>
